<compile_context>
chip_gen: v7x
topology: tpu7x:2x2x1
jax: 0.10.0
libtpu: 0.0.40
codegen_flags: <defaults>
</compile_context>

<pallas_src>
import functools

import jax
import jax.numpy as jnp
from jax.experimental import pallas as pl
from jax.experimental.pallas import tpu as pltpu


def _silu(x):
    return x * jax.nn.sigmoid(x)


def _fused_forward_kernel(p_ref, ws_ref, wp_ref, wc_ref, b_ref,
                          feat_ref, logits_ref, *, HW):
    """Fused backbone + head for one image.

    p_ref:      (KH*KW*Cin, HW)   bf16  im2col patches (HW on the 128-lane axis)
    ws_ref:     (Cmid, KH*KW*Cin) bf16  3x3 conv weights (transposed)
    wp_ref:     (Cfeat, Cmid)     bf16  1x1 conv weights (transposed)
    wc_ref:     (2, Cfeat)        f32   classifier weights
    b_ref:      (2, 1)            f32   classifier bias
    feat_ref:   (Cfeat, HW)       f32   per-image feature map (== NCHW layout)
    logits_ref: (2, 1)            f32
    """
    # Stage 1: 3x3 SAME conv as a single im2col matmul (K = KH*KW*Cin), + SiLU.
    stem = _silu(jnp.dot(ws_ref[...], p_ref[...],
                         preferred_element_type=jnp.float32))          # (Cmid, HW) f32
    # Stage 2: 1x1 conv + SiLU -> lane-dense (Cfeat, HW) feature map.
    feat = _silu(jnp.dot(wp_ref[...], stem.astype(wp_ref.dtype),
                         preferred_element_type=jnp.float32))          # (Cfeat, HW) f32
    feat_ref[...] = feat
    # Head: AdaptiveAvgPool2d(1) as an MXU matvec, then Linear(n_features, 2).
    ones_col = jnp.full((HW, 1), 1.0 / HW, dtype=jnp.float32)
    pooled = jnp.dot(feat, ones_col, preferred_element_type=jnp.float32)   # (Cfeat, 1)
    logits_ref[...] = (jnp.dot(wc_ref[...], pooled,
                               preferred_element_type=jnp.float32)
                       + b_ref[...])                                       # (2, 1)


def custom_model_v2_forward(x_nchw, params):
    """Returns (logits, features) exactly like CustomModel_v2.forward.

    x_nchw:   (B, Cin, H, W) float32, NCHW like PyTorch.
    features: (B, n_features, H, W) float32, NCHW like PyTorch.
    """
    w_stem, w_pw, w_cls_t, b_cls = params
    B, Cin, H, W = x_nchw.shape
    KH, KW, _, Cmid = w_stem.shape
    Cfeat = w_pw.shape[1]
    HW = H * W
    K = KH * KW * Cin

    # --- XLA-side data plumbing (tiny; all FLOPs live in the fused kernel) ---
    # SAME padding + im2col patch matrix (B, KH*KW*Cin, H*W) in bf16 for the MXU.
    # NOTE: at real EfficientNet-B1 input sizes the im2col expansion should move
    # in-kernel; at 16x16 it is ~27 KB and cheaper than any extra kernel launch.
    ph, pw = KH // 2, KW // 2
    xp = jnp.pad(x_nchw.astype(jnp.float32),
                 ((0, 0), (0, 0), (ph, ph), (pw, pw)))
    taps = [xp[:, :, kh:kh + H, kw:kw + W]
            for kh in range(KH) for kw in range(KW)]                  # each (B,Cin,H,W)
    patches = jnp.stack(taps, axis=1).reshape(B, K, HW).astype(jnp.bfloat16)

    ws_t = jnp.transpose(w_stem.reshape(K, Cmid)).astype(jnp.bfloat16)     # (Cmid, K)
    wp_t = jnp.transpose(w_pw).astype(jnp.bfloat16)                        # (Cfeat, Cmid)
    wc = jnp.transpose(w_cls_t).astype(jnp.float32)                        # (2, Cfeat)
    b_col = b_cls.reshape(2, 1).astype(jnp.float32)                        # (2, 1)

    feat_flat, logits_col = pl.pallas_call(
        functools.partial(_fused_forward_kernel, HW=HW),
        out_shape=(jax.ShapeDtypeStruct((B, Cfeat, HW), jnp.float32),
                   jax.ShapeDtypeStruct((B, 2, 1), jnp.float32)),
        grid=(B,),
        in_specs=[pl.BlockSpec((None, K, HW), lambda i: (i, 0, 0)),
                  pl.BlockSpec((Cmid, K), lambda i: (0, 0)),
                  pl.BlockSpec((Cfeat, Cmid), lambda i: (0, 0)),
                  pl.BlockSpec((2, Cfeat), lambda i: (0, 0)),
                  pl.BlockSpec((2, 1), lambda i: (0, 0))],
        out_specs=(pl.BlockSpec((None, Cfeat, HW), lambda i: (i, 0, 0)),
                   pl.BlockSpec((None, 2, 1), lambda i: (i, 0, 0))),
        compiler_params=pltpu.CompilerParams(
            dimension_semantics=("parallel",),
            vmem_limit_bytes=32 * 1024 * 1024),
    )(patches, ws_t, wp_t, wc, b_col)

    features = feat_flat.reshape(B, Cfeat, H, W)   # (Cfeat, HW) per image IS NCHW
    logits = logits_col.reshape(B, 2)
    return logits, features


if __name__ == "__main__":
    # Small, deterministic shapes consistent with the forward pass:
    # batch=2, 3 input channels, 16x16 spatial, n_features=32 (stand-in for 1280).
    key = jax.random.PRNGKey(0)
    k_x, k_stem, k_pw, k_cls, k_b = jax.random.split(key, 5)

    B, Cin, H, W = 2, 3, 16, 16
    Cmid, Cfeat = 16, 32

    x = jax.random.normal(k_x, (B, Cin, H, W), dtype=jnp.float32)

    # TODO(synk): weights are synthetic stand-ins for the timm EfficientNet-B1 backbone;
    # no checkpoint is loaded.
    w_stem = jax.random.normal(k_stem, (3, 3, Cin, Cmid), dtype=jnp.float32) * 0.1
    w_pw = jax.random.normal(k_pw, (Cmid, Cfeat), dtype=jnp.float32) * 0.1
    # nn.Linear(n_features, 2): stored as (2, n_features) in PyTorch; pass transposed.
    w_cls_t = jax.random.normal(k_cls, (Cfeat, 2), dtype=jnp.float32) * 0.1
    b_cls = jax.random.normal(k_b, (1, 2), dtype=jnp.float32) * 0.1

    fwd = jax.jit(custom_model_v2_forward)
    logits, features = fwd(x, (w_stem, w_pw, w_cls_t, b_cls))
    jax.block_until_ready((logits, features))

    assert logits.shape == (B, 2)
    assert features.shape == (B, Cfeat, H, W)
    print("KERNEL_OK")
</pallas_src>

<mosaic_0001>
module attributes {stable_mosaic.version = 11 : i64} {
  func.func @_fused_forward_kernel(%arg0: i32, %arg1: memref<1x27x256xbf16, #tpu.memory_space<vmem>>, %arg2: memref<16x27xbf16, #tpu.memory_space<vmem>>, %arg3: memref<32x16xbf16, #tpu.memory_space<vmem>>, %arg4: memref<2x32xf32, #tpu.memory_space<vmem>>, %arg5: memref<2x1xf32, #tpu.memory_space<vmem>>, %arg6: memref<1x32x256xf32, #tpu.memory_space<vmem>>, %arg7: memref<1x2x1xf32, #tpu.memory_space<vmem>>) attributes {dimension_semantics = [#tpu.dimension_semantics<parallel>], iteration_bounds = array<i64: 2>, scalar_prefetch = 0 : i64, scratch_operands = 0 : i64, tpu.core_type = #tpu.core_type<tc>, window_params = [{transform_indices = @transform_0, window_bounds = array<i64: 1, 27, 256>}, {pipeline_mode = #tpu.pipeline_mode<synchronous>, transform_indices = @transform_1, window_bounds = array<i64: 16, 27>}, {pipeline_mode = #tpu.pipeline_mode<synchronous>, transform_indices = @transform_2, window_bounds = array<i64: 32, 16>}, {pipeline_mode = #tpu.pipeline_mode<synchronous>, transform_indices = @transform_3, window_bounds = array<i64: 2, 32>}, {pipeline_mode = #tpu.pipeline_mode<synchronous>, transform_indices = @transform_4, window_bounds = array<i64: 2, 1>}, {transform_indices = @transform_5, window_bounds = array<i64: 1, 32, 256>}, {transform_indices = @transform_6, window_bounds = array<i64: 1, 2, 1>}]} {
    %c0 = arith.constant 0 : index
    %c0_0 = arith.constant 0 : index
    %0 = vector.load %arg2[%c0, %c0_0] : memref<16x27xbf16, #tpu.memory_space<vmem>>, vector<16x27xbf16>
    %c0_1 = arith.constant 0 : index
    %c0_2 = arith.constant 0 : index
    %c0_3 = arith.constant 0 : index
    %1 = vector.load %arg1[%c0_1, %c0_2, %c0_3] : memref<1x27x256xbf16, #tpu.memory_space<vmem>>, vector<1x27x256xbf16>
    %2 = vector.shape_cast %1 : vector<1x27x256xbf16> to vector<27x256xbf16>
    %cst = arith.constant dense<0.000000e+00> : vector<16x256xf32>
    %3 = tpu.matmul %0, %2, %cst {dimension_numbers = #tpu.dot_dimension_numbers<[1], [0], [0], [1], [0, 0, 1, 1], [], []>} : vector<16x27xbf16>, vector<27x256xbf16>, vector<16x256xf32> -> vector<16x256xf32>
    %4 = arith.negf %3 : vector<16x256xf32>
    %5 = math.exp %4 : vector<16x256xf32>
    %cst_4 = arith.constant 1.000000e+00 : f32
    %6 = vector.broadcast %cst_4 : f32 to vector<16x256xf32>
    %7 = arith.addf %6, %5 : vector<16x256xf32>
    %8 = arith.divf %6, %7 : vector<16x256xf32>
    %9 = arith.mulf %3, %8 : vector<16x256xf32>
    %c0_5 = arith.constant 0 : index
    %c0_6 = arith.constant 0 : index
    %10 = vector.load %arg3[%c0_5, %c0_6] : memref<32x16xbf16, #tpu.memory_space<vmem>>, vector<32x16xbf16>
    %11 = arith.truncf %9 : vector<16x256xf32> to vector<16x256xbf16>
    %cst_7 = arith.constant dense<0.000000e+00> : vector<32x256xf32>
    %12 = tpu.matmul %10, %11, %cst_7 {dimension_numbers = #tpu.dot_dimension_numbers<[1], [0], [0], [1], [0, 0, 1, 1], [], []>} : vector<32x16xbf16>, vector<16x256xbf16>, vector<32x256xf32> -> vector<32x256xf32>
    %13 = arith.negf %12 : vector<32x256xf32>
    %14 = math.exp %13 : vector<32x256xf32>
    %cst_8 = arith.constant 1.000000e+00 : f32
    %15 = vector.broadcast %cst_8 : f32 to vector<32x256xf32>
    %16 = arith.addf %15, %14 : vector<32x256xf32>
    %17 = arith.divf %15, %16 : vector<32x256xf32>
    %18 = arith.mulf %12, %17 : vector<32x256xf32>
    %c0_9 = arith.constant 0 : index
    %c0_10 = arith.constant 0 : index
    %c0_11 = arith.constant 0 : index
    %19 = vector.load %arg6[%c0_9, %c0_10, %c0_11] : memref<1x32x256xf32, #tpu.memory_space<vmem>>, vector<1x32x256xf32>
    %20 = vector.shape_cast %19 : vector<1x32x256xf32> to vector<32x256xf32>
    %21 = vector.shape_cast %18 : vector<32x256xf32> to vector<1x32x256xf32>
    tpu.vector_store %arg6[%c0_9, %c0_10, %c0_11], %21 {strides = array<i32>} : memref<1x32x256xf32, #tpu.memory_space<vmem>>, vector<1x32x256xf32>,
    %cst_12 = arith.constant 3.906250e-03 : f32
    %22 = vector.broadcast %cst_12 : f32 to vector<256x1xf32>
    %cst_13 = arith.constant dense<0.000000e+00> : vector<32x1xf32>
    %23 = tpu.matmul %18, %22, %cst_13 {dimension_numbers = #tpu.dot_dimension_numbers<[1], [0], [0], [1], [0, 0, 1, 1], [], []>} : vector<32x256xf32>, vector<256x1xf32>, vector<32x1xf32> -> vector<32x1xf32>
    %c0_14 = arith.constant 0 : index
    %c0_15 = arith.constant 0 : index
    %24 = vector.load %arg4[%c0_14, %c0_15] : memref<2x32xf32, #tpu.memory_space<vmem>>, vector<2x32xf32>
    %cst_16 = arith.constant dense<0.000000e+00> : vector<2x1xf32>
    %25 = tpu.matmul %24, %23, %cst_16 {dimension_numbers = #tpu.dot_dimension_numbers<[1], [0], [0], [1], [0, 0, 1, 1], [], []>} : vector<2x32xf32>, vector<32x1xf32>, vector<2x1xf32> -> vector<2x1xf32>
    %c0_17 = arith.constant 0 : index
    %c0_18 = arith.constant 0 : index
    %26 = vector.load %arg5[%c0_17, %c0_18] : memref<2x1xf32, #tpu.memory_space<vmem>>, vector<2x1xf32>
    %27 = arith.addf %25, %26 : vector<2x1xf32>
    %c0_19 = arith.constant 0 : index
    %c0_20 = arith.constant 0 : index
    %c0_21 = arith.constant 0 : index
    %28 = vector.load %arg7[%c0_19, %c0_20, %c0_21] : memref<1x2x1xf32, #tpu.memory_space<vmem>>, vector<1x2x1xf32>
    %29 = vector.shape_cast %28 : vector<1x2x1xf32> to vector<2x1xf32>
    %30 = vector.shape_cast %27 : vector<2x1xf32> to vector<1x2x1xf32>
    tpu.vector_store %arg7[%c0_19, %c0_20, %c0_21], %30 {strides = array<i32>} : memref<1x2x1xf32, #tpu.memory_space<vmem>>, vector<1x2x1xf32>,
    return
  }
  func.func @transform_0(%arg0: i32) -> (i32, i32, i32) {
    %c0_i32 = arith.constant 0 : i32
    %c0_i32_0 = arith.constant 0 : i32
    %c0_i32_1 = arith.constant 0 : i32
    return %arg0, %c0_i32, %c0_i32_0 : i32, i32, i32
  }
  func.func @transform_1(%arg0: i32) -> (i32, i32) {
    %c0_i32 = arith.constant 0 : i32
    %c0_i32_0 = arith.constant 0 : i32
    %c0_i32_1 = arith.constant 0 : i32
    return %c0_i32, %c0_i32_0 : i32, i32
  }
  func.func @transform_2(%arg0: i32) -> (i32, i32) {
    %c0_i32 = arith.constant 0 : i32
    %c0_i32_0 = arith.constant 0 : i32
    %c0_i32_1 = arith.constant 0 : i32
    return %c0_i32, %c0_i32_0 : i32, i32
  }
  func.func @transform_3(%arg0: i32) -> (i32, i32) {
    %c0_i32 = arith.constant 0 : i32
    %c0_i32_0 = arith.constant 0 : i32
    %c0_i32_1 = arith.constant 0 : i32
    return %c0_i32, %c0_i32_0 : i32, i32
  }
  func.func @transform_4(%arg0: i32) -> (i32, i32) {
    %c0_i32 = arith.constant 0 : i32
    %c0_i32_0 = arith.constant 0 : i32
    %c0_i32_1 = arith.constant 0 : i32
    return %c0_i32, %c0_i32_0 : i32, i32
  }
  func.func @transform_5(%arg0: i32) -> (i32, i32, i32) {
    %c0_i32 = arith.constant 0 : i32
    %c0_i32_0 = arith.constant 0 : i32
    %c0_i32_1 = arith.constant 0 : i32
    return %arg0, %c0_i32, %c0_i32_0 : i32, i32, i32
  }
  func.func @transform_6(%arg0: i32) -> (i32, i32, i32) {
    %c0_i32 = arith.constant 0 : i32
    %c0_i32_0 = arith.constant 0 : i32
    %c0_i32_1 = arith.constant 0 : i32
    return %arg0, %c0_i32, %c0_i32_0 : i32, i32, i32
  }
}

</mosaic_0001>

<llo_original>
// kernel: custom_model_v2_forward.1
$region0: #{custom_model_v2_forward.1}
  #allocation0 [shape = 'u32[]', space=smem, size = 0x4, offset = 0x4, fixed_abs, tag = 'smem constant byte address 0x4 - core index']
  #allocation1 [shape = 'u32[144,128]{1,0:T(1,128)}', space=vmem, size = 0x12000, scoped, tag = 'internal scratch']
  %s0 = inlined_call_operand.vmem [shape: bf16[2,27,256], index: 0, kind: input, shape index: {}]
  %s1 = inlined_call_operand.vmem [shape: bf16[16,27], index: 1, kind: input, shape index: {}]
  %s2 = inlined_call_operand.vmem [shape: bf16[32,16], index: 2, kind: input, shape index: {}]
  %s3 = inlined_call_operand.vmem [shape: f32[2,32], index: 3, kind: input, shape index: {}]
  %s4 = inlined_call_operand.vmem [shape: f32[2,1], index: 4, kind: input, shape index: {}]
  %s5 = inlined_call_operand.vmem [shape: f32[2,32,256], index: 5, kind: output, shape index: {0}]
  %s6 = inlined_call_operand.vmem [shape: f32[2,2,1], index: 6, kind: output, shape index: {1}]
  %7 = xla_tuple %s5, %s6
  %s8 = sld [smem:[#allocation0]]
  $region61: #{custom_model_v2_forward.1} parent=0
    _
  %s10 = ssub.s32 1, %s8
  %s11 = scalar_select 0, %s10, %s8
  loop: start=0, step=1, limit=4
  $region2: #{custom_model_v2_forward.1} parent=0 // loop_pre_header
    _
  $region3: #{custom_model_v2_forward.1} parent=0 // loop_header
    %s13 = sphi 0, %s17
    %p14 = scmp.ge.s32.totalorder %s13, 4
    %s23 = sphi 0, %s25
    %s26 = sphi 0, %s23
    %s27 = sphi 0, %s26
    %s43 = sphi 0, %s27
    %s47 = sphi 0, %s47
    %s49 = sphi 0, %s47
    %s50 = sphi 0, %s49
    %s64 = sphi 0, %s50
    %s68 = sphi 0, %s68
    %s70 = sphi 0, %s68
    %s71 = sphi 0, %s70
    %s85 = sphi 0, %s71
    %s89 = sphi 0, %s89
    %s91 = sphi 0, %s89
    %s92 = sphi 0, %s91
    %s106 = sphi 0, %s92
    %s110 = sphi 0, %s110
    %s112 = sphi 0, %s110
    %s113 = sphi 0, %s112
    %s127 = sphi 0, %s113
    %s133 = sphi 0, %s135
    %s136 = sphi 0, %s133
    %s137 = sphi 0, %s136
    %s153 = sphi 0, %s137
    %s159 = sphi 0, %s161
    %s162 = sphi 0, %s159
    %s163 = sphi 0, %s162
    %s179 = sphi 0, %s163
  $region4: #{custom_model_v2_forward.1} parent=0 // loop_header_branch
    %16 = sbr.rel (%p14) target = $region8
  $region5: #{custom_model_v2_forward.1} parent=0 // loop_body
    %s18 = ssub.s32 %s13, 1
    %s19 = ssub.s32 %s13, 2
    %s20 = sadd.s32 %s13, 1
    %s21 = ssub.s32 %s13, %s20
    %p22 = scmp.eq.s32.totalorder %s21, 0
    %s24 = sadd.s32 %s23, 1
    %s25 = scalar_select %p22, %s23, %s24
    %p28 = pneg %p22
    %p29 = scmp.eq.s32.totalorder %s13, 1
    %p30 = por %p28, %p29
    %p31 = scmp.ne.s32.totalorder %s23, %s26
    %p32 = scmp.eq.s32.totalorder %s13, 0
    %p33 = por %p31, %p32
    %p34 = scmp.ne.s32.totalorder %s23, %s26
    %p35 = scmp.eq.s32.totalorder %s18, 1
    %p36 = por %p34, %p35
    %p37 = scmp.ne.s32.totalorder %s26, %s27
    %p38 = scmp.eq.s32.totalorder %s18, 0
    %p39 = por %p37, %p38
    %p40 = scmp.ne.s32.totalorder %s26, %s27
    %p41 = scmp.eq.s32.totalorder %s19, 1
    %p42 = por %p40, %p41
    %p44 = scmp.ne.s32.totalorder %s27, %s43
    %p45 = scmp.eq.s32.totalorder %s19, 0
    %p46 = por %p44, %p45
    %s48 = sadd.s32 %s47, 1
    %p51 = scmp.eq.s32.totalorder %s13, 1
    %p52 = scmp.ne.s32.totalorder %s47, %s49
    %p53 = scmp.eq.s32.totalorder %s13, 0
    %p54 = por %p52, %p53
    %p55 = scmp.ne.s32.totalorder %s47, %s49
    %p56 = scmp.eq.s32.totalorder %s18, 1
    %p57 = por %p55, %p56
    %p58 = scmp.ne.s32.totalorder %s49, %s50
    %p59 = scmp.eq.s32.totalorder %s18, 0
    %p60 = por %p58, %p59
    %p61 = scmp.ne.s32.totalorder %s49, %s50
    %p62 = scmp.eq.s32.totalorder %s19, 1
    %p63 = por %p61, %p62
    %p65 = scmp.ne.s32.totalorder %s50, %s64
    %p66 = scmp.eq.s32.totalorder %s19, 0
    %p67 = por %p65, %p66
    %s69 = sadd.s32 %s68, 1
    %p72 = scmp.eq.s32.totalorder %s13, 1
    %p73 = scmp.ne.s32.totalorder %s68, %s70
    %p74 = scmp.eq.s32.totalorder %s13, 0
    %p75 = por %p73, %p74
    %p76 = scmp.ne.s32.totalorder %s68, %s70
    %p77 = scmp.eq.s32.totalorder %s18, 1
    %p78 = por %p76, %p77
    %p79 = scmp.ne.s32.totalorder %s70, %s71
    %p80 = scmp.eq.s32.totalorder %s18, 0
    %p81 = por %p79, %p80
    %p82 = scmp.ne.s32.totalorder %s70, %s71
    %p83 = scmp.eq.s32.totalorder %s19, 1
    %p84 = por %p82, %p83
    %p86 = scmp.ne.s32.totalorder %s71, %s85
    %p87 = scmp.eq.s32.totalorder %s19, 0
    %p88 = por %p86, %p87
    %s90 = sadd.s32 %s89, 1
    %p93 = scmp.eq.s32.totalorder %s13, 1
    %p94 = scmp.ne.s32.totalorder %s89, %s91
    %p95 = scmp.eq.s32.totalorder %s13, 0
    %p96 = por %p94, %p95
    %p97 = scmp.ne.s32.totalorder %s89, %s91
    %p98 = scmp.eq.s32.totalorder %s18, 1
    %p99 = por %p97, %p98
    %p100 = scmp.ne.s32.totalorder %s91, %s92
    %p101 = scmp.eq.s32.totalorder %s18, 0
    %p102 = por %p100, %p101
    %p103 = scmp.ne.s32.totalorder %s91, %s92
    %p104 = scmp.eq.s32.totalorder %s19, 1
    %p105 = por %p103, %p104
    %p107 = scmp.ne.s32.totalorder %s92, %s106
    %p108 = scmp.eq.s32.totalorder %s19, 0
    %p109 = por %p107, %p108
    %s111 = sadd.s32 %s110, 1
    %p114 = scmp.eq.s32.totalorder %s13, 1
    %p115 = scmp.ne.s32.totalorder %s110, %s112
    %p116 = scmp.eq.s32.totalorder %s13, 0
    %p117 = por %p115, %p116
    %p118 = scmp.ne.s32.totalorder %s110, %s112
    %p119 = scmp.eq.s32.totalorder %s18, 1
    %p120 = por %p118, %p119
    %p121 = scmp.ne.s32.totalorder %s112, %s113
    %p122 = scmp.eq.s32.totalorder %s18, 0
    %p123 = por %p121, %p122
    %p124 = scmp.ne.s32.totalorder %s112, %s113
    %p125 = scmp.eq.s32.totalorder %s19, 1
    %p126 = por %p124, %p125
    %p128 = scmp.ne.s32.totalorder %s113, %s127
    %p129 = scmp.eq.s32.totalorder %s19, 0
    %p130 = por %p128, %p129
    %s131 = ssub.s32 %s13, %s20
    %p132 = scmp.eq.s32.totalorder %s131, 0
    %s134 = sadd.s32 %s133, 1
    %s135 = scalar_select %p132, %s133, %s134
    %p138 = pneg %p132
    %p139 = scmp.eq.s32.totalorder %s13, 1
    %p140 = por %p138, %p139
    %p141 = scmp.ne.s32.totalorder %s133, %s136
    %p142 = scmp.eq.s32.totalorder %s13, 0
    %p143 = por %p141, %p142
    %p144 = scmp.ne.s32.totalorder %s133, %s136
    %p145 = scmp.eq.s32.totalorder %s18, 1
    %p146 = por %p144, %p145
    %p147 = scmp.ne.s32.totalorder %s136, %s137
    %p148 = scmp.eq.s32.totalorder %s18, 0
    %p149 = por %p147, %p148
    %p150 = scmp.ne.s32.totalorder %s136, %s137
    %p151 = scmp.eq.s32.totalorder %s19, 1
    %p152 = por %p150, %p151
    %p154 = scmp.ne.s32.totalorder %s137, %s153
    %p155 = scmp.eq.s32.totalorder %s19, 0
    %p156 = por %p154, %p155
    %s157 = ssub.s32 %s13, %s20
    %p158 = scmp.eq.s32.totalorder %s157, 0
    %s160 = sadd.s32 %s159, 1
    %s161 = scalar_select %p158, %s159, %s160
    %p164 = pneg %p158
    %p165 = scmp.eq.s32.totalorder %s13, 1
    %p166 = por %p164, %p165
    %p167 = scmp.ne.s32.totalorder %s159, %s162
    %p168 = scmp.eq.s32.totalorder %s13, 0
    %p169 = por %p167, %p168
    %p170 = scmp.ne.s32.totalorder %s159, %s162
    %p171 = scmp.eq.s32.totalorder %s18, 1
    %p172 = por %p170, %p171
    %p173 = scmp.ne.s32.totalorder %s162, %s163
    %p174 = scmp.eq.s32.totalorder %s18, 0
    %p175 = por %p173, %p174
    %p176 = scmp.ne.s32.totalorder %s162, %s163
    %p177 = scmp.eq.s32.totalorder %s19, 1
    %p178 = por %p176, %p177
    %p180 = scmp.ne.s32.totalorder %s163, %s179
    %p181 = scmp.eq.s32.totalorder %s19, 0
    %p182 = por %p180, %p181
    %p183 = scmp.le.s32.totalorder 1, %s13
    %p184 = scmp.lt.s32.totalorder %s13, 3
    %p185 = pnand %p183, %p184
    %p186 = pneg %p185
    // Predicated region
    $region9: #{custom_model_v2_forward.1} parent=5 // pred_check
      _
    $region10: #{custom_model_v2_forward.1} parent=5 // pred_check_branch
      %188 = sbr.rel (%p185) target = $region12
    $region11: #{custom_model_v2_forward.1} parent=5 // pred_region
      %s189 = ssub.s32 %s13, 1
      // Predicated region
      $region13: #{custom_model_v2_forward.1} parent=11 // pred_check
        %p190 = pneg %p60
      $region14: #{custom_model_v2_forward.1} parent=11 // pred_check_branch
        %192 = sbr.rel (%p190) target = $region16
      $region15: #{custom_model_v2_forward.1} parent=11 // pred_region
        _
      $region16: #{custom_model_v2_forward.1} parent=11 // pred_fallthru
        _
      // Predicated region
      $region17: #{custom_model_v2_forward.1} parent=11 // pred_check
        %p193 = pneg %p81
      $region18: #{custom_model_v2_forward.1} parent=11 // pred_check_branch
        %195 = sbr.rel (%p193) target = $region20
      $region19: #{custom_model_v2_forward.1} parent=11 // pred_region
        _
      $region20: #{custom_model_v2_forward.1} parent=11 // pred_fallthru
        _
      // Predicated region
      $region21: #{custom_model_v2_forward.1} parent=11 // pred_check
        %p196 = pneg %p102
      $region22: #{custom_model_v2_forward.1} parent=11 // pred_check_branch
        %198 = sbr.rel (%p196) target = $region24
      $region23: #{custom_model_v2_forward.1} parent=11 // pred_region
        _
      $region24: #{custom_model_v2_forward.1} parent=11 // pred_fallthru
        _
      // Predicated region
      $region25: #{custom_model_v2_forward.1} parent=11 // pred_check
        %p199 = pneg %p123
      $region26: #{custom_model_v2_forward.1} parent=11 // pred_check_branch
        %201 = sbr.rel (%p199) target = $region28
      $region27: #{custom_model_v2_forward.1} parent=11 // pred_region
        _
      $region28: #{custom_model_v2_forward.1} parent=11 // pred_fallthru
        _
    $region12: #{custom_model_v2_forward.1} parent=5 // pred_fallthru
      _
    %p202 = scmp.lt.s32.totalorder %s13, 2
    // Predicated region
    $region29: #{custom_model_v2_forward.1} parent=5 // pred_check
      %p203 = pneg %p202
    $region30: #{custom_model_v2_forward.1} parent=5 // pred_check_branch
      %205 = sbr.rel (%p203) target = $region32
    $region31: #{custom_model_v2_forward.1} parent=5 // pred_region
      // Predicated region
      $region33: #{custom_model_v2_forward.1} parent=31 // pred_check
        %p206 = pneg %p33
      $region34: #{custom_model_v2_forward.1} parent=31 // pred_check_branch
        %208 = sbr.rel (%p206) target = $region36
      $region35: #{custom_model_v2_forward.1} parent=31 // pred_region
        %p209 = scmp.lt.s32.totalorder %s13, 1
        %s210 = scalar_select %p209, %s13, 1
        %s211 = smul.addr %s210, 8
        %s212 = smul.addr %s211, 4
        %s213 = scalar_lea.vmem %s0, %s212
      $region36: #{custom_model_v2_forward.1} parent=31 // pred_fallthru
        _
    $region32: #{custom_model_v2_forward.1} parent=5 // pred_fallthru
      _
    %p214 = scmp.le.s32.totalorder 1, %s13
    %p215 = scmp.lt.s32.totalorder %s13, 3
    %p216 = pnand %p214, %p215
    %p217 = pneg %p216
    // Predicated region
    $region37: #{custom_model_v2_forward.1} parent=5 // pred_check
      _
    $region38: #{custom_model_v2_forward.1} parent=5 // pred_check_branch
      %219 = sbr.rel (%p216) target = $region40
    $region39: #{custom_model_v2_forward.1} parent=5 // pred_region
      %s220 = ssub.s32 %s13, 1
      %p221 = scmp.lt.s32.totalorder %s18, 1
      %s222 = scalar_select %p221, %s18, 1
      %s223 = smul.addr %s222, 8
      %s224 = smul.addr %s223, 4
      %s225 = scalar_lea.vmem %s0, %s224
      %p226 = pneg %p39
      %p227 = pneg %p36
      %p228 = pneg %p60
      %p229 = pneg %p57
      %p230 = pneg %p81
      %p231 = pneg %p78
      %p232 = pneg %p102
      %p233 = pneg %p99
      %p234 = pneg %p123
      %p235 = pneg %p120
      %p236 = pneg %p149
      %p237 = pneg %p146
      %p238 = scmp.lt.s32.totalorder %s18, 1
      %s239 = scalar_select %p238, %s18, 1
      %s240 = smul.addr %s239, 8
      %s241 = smul.addr %s240, 8
      %s242 = scalar_lea.vmem %s5, %s241
      %p243 = pneg %p175
      %p244 = pneg %p172
      %p245 = scmp.lt.s32.totalorder %s18, 1
      %s246 = scalar_select %p245, %s18, 1
      %s247 = smul.addr %s246, 2
      %s248 = scalar_lea.vmem %s6, %s247
      %p249 = scmp.lt.s32.totalorder %s18, 1
      %s250 = scalar_select %p249, %s18, 1
      %s251 = smul.addr %s250, 8
      %s252 = smul.addr %s251, 4
      %s253 = scalar_lea.vmem %s0, %s252
      %p254 = scmp.lt.s32.totalorder %s18, 1
      %s255 = scalar_select %p254, %s18, 1
      %s256 = smul.addr %s255, 8
      %s257 = smul.addr %s256, 8
      %s258 = scalar_lea.vmem %s5, %s257
      %p259 = scmp.lt.s32.totalorder %s18, 1
      %s260 = scalar_select %p259, %s18, 1
      %s261 = smul.addr %s260, 2
      %s262 = scalar_lea.vmem %s6, %s261
      %v264 = vld [vmem:[%s1] sm:$0xf]
      %v265 = vld [vmem:[%s1 + $0x4] sm:$0xf]
      %v266 = vld [vmem:[%s253] sm:$0xff]
      %v267 = vld [vmem:[%s253 + $0x8] sm:$0xff]
      %v268 = vld [vmem:[%s253 + $0x10] sm:$0xff]
      %v269 = vld [vmem:[%s253 + $0x18] sm:$0x33]
      %v272 = vunpack.c.l.b16 %v264
      %v273 = vunpack.c.l.b16 %v265
      %v274 = vpack.c.b16 %v273, %v272
      %v279 = vunpack.c.l.b16 %v266
      %v280 = vunpack.c.h.b16 %v266
      %v281 = vunpack.c.l.b16 %v267
      %v282 = vunpack.c.h.b16 %v267
      %v283 = vunpack.c.l.b16 %v268
      %v284 = vunpack.c.h.b16 %v268
      %v285 = vunpack.c.l.b16 %v269
      %v286 = vunpack.c.h.b16 %v269
      %v287 = vpack.c.b16 %v281, %v279
      %v288 = vpack.c.b16 %v282, %v280
      %v289 = vpack.c.b16 %v285, %v283
      %v290 = vpack.c.b16 %v286, %v284
      %vm293 = vcmask 220160
      %v295 = vsel %vm293, %v274, 0
      %vm297 = vcmask 1044480
      %vm298 = vcmask 1045504
      %v299 = vsel %vm297, 4294967295, 65535
      %v300 = vsel %vm298, %v299, 0
      %v302 = vand.u32 %v289, %v300
      %v305 = vand.u32 %v290, %v300
      %307 = vmatprep.subr.bf16.mxu0 %v288
      %308 = vmatpush1.bf16.msra.mxu0 %v287
      %309 = vmatprep.subr.bf16.mxu0 %v305
      %310 = vmatpush1.bf16.msra.mxu0 %v302
      %311 = vmatprep.subr.bf16.mxu0 0
      %312 = vmatpush1.bf16.msra.mxu0 0
      %313 = vmatprep.subr.bf16.mxu0 0
      %314 = vmatpush1.bf16.msra.mxu0 0
      %315 = vmatprep.subr.bf16.mxu0 0
      %316 = vmatpush1.bf16.msra.mxu0 0
      %317 = vmatprep.subr.bf16.mxu0 0
      %318 = vmatpush1.bf16.msra.mxu0 0
      %319 = vmatprep.subr.bf16.mxu0 0
      %320 = vmatpush1.bf16.msra.mxu0 0
      %321 = vmatprep.subr.bf16.mxu0 0
      %322 = vmatpush1.bf16.msra.mxu0 0
      %323 = vmatprep.subr.bf16.mxu0 0
      %324 = vmatpush1.bf16.msra.mxu0 0
      %325 = vmatprep.subr.bf16.mxu0 0
      %326 = vmatpush1.bf16.msra.mxu0 0
      %327 = vmatprep.subr.bf16.mxu0 0
      %328 = vmatpush1.bf16.msra.mxu0 0
      %329 = vmatprep.subr.bf16.mxu0 0
      %330 = vmatpush1.bf16.msra.mxu0 0
      %331 = vmatprep.subr.bf16.mxu0 0
      %332 = vmatpush1.bf16.msra.mxu0 0
      %333 = vmatprep.subr.bf16.mxu0 0
      %334 = vmatpush1.bf16.msra.mxu0 0
      %335 = vmatprep.subr.bf16.mxu0 0
      %336 = vmatpush1.bf16.msra.mxu0 0
      %337 = vmatprep.subr.bf16.mxu0 0
      %338 = vmatpush1.bf16.msra.mxu0 0
      %339 = vmatprep.mubr.bf16.mxu0 0
      %340 = vmatmul.mubr.bf16.gmra.mrb[0].mxu0 %v295
      %v341 = vpop.f32.mrb[0].mxu0
      %v342 = vadd.f32 0.0, %v341
      %v343 = vpop.f32.mrb[0].mxu0
      %v344 = vadd.f32 0.0, %v343
      %v345 = vpop.f32.mrb[0].mxu0
      %v346 = vadd.f32 0.0, %v345
      %v347 = vpop.f32.mrb[0].mxu0
      %v348 = vadd.f32 0.0, %v347
      %349 = vdwg.mxu0
      %v350 = vxor.u32 %v342, 2147483648
      %v351 = vxor.u32 %v344, 2147483648
      %v352 = vxor.u32 %v346, 2147483648
      %v353 = vxor.u32 %v348, 2147483648
      %v354 = vmul.f32 %v350, 1.442695
      %v355 = vpow.pop %v354
      %v356 = vmul.f32 %v351, 1.442695
      %v357 = vpow.pop %v356
      %v358 = vmul.f32 %v352, 1.442695
      %v359 = vpow.pop %v358
      %v360 = vmul.f32 %v353, 1.442695
      %v361 = vpow.pop %v360
      %v362 = vadd.f32 %v355, 1.0
      %v363 = vadd.f32 %v357, 1.0
      %v364 = vadd.f32 %v359, 1.0
      %v365 = vadd.f32 %v361, 1.0
      %v366 = vrcp.pop %v362
      %v367 = vmul.f32 1.0, %v366
      %v368 = vrcp.pop %v363
      %v369 = vmul.f32 1.0, %v368
      %v370 = vrcp.pop %v364
      %v371 = vmul.f32 1.0, %v370
      %v372 = vrcp.pop %v365
      %v373 = vmul.f32 1.0, %v372
      %v374 = vmul.f32 %v342, %v367
      %v375 = vmul.f32 %v344, %v369
      %v376 = vmul.f32 %v346, %v371
      %v377 = vmul.f32 %v348, %v373
      %v378 = vld [vmem:[%s2] sm:$0xf]
      %v379 = vld [vmem:[%s2 + $0x4] sm:$0xf]
      %v380 = vld [vmem:[%s2 + $0x8] sm:$0xf]
      %v381 = vld [vmem:[%s2 + $0xc] sm:$0xf]
      %v382 = vpack.c.bf16 %v376, %v374
      %v383 = vpack.c.bf16 %v377, %v375
      %v388 = vunpack.c.l.b16 %v378
      %v389 = vunpack.c.l.b16 %v379
      %v390 = vunpack.c.l.b16 %v380
      %v391 = vunpack.c.l.b16 %v381
      %v392 = vpack.c.b16 %v389, %v388
      %v393 = vpack.c.b16 %v391, %v390
      %vm394 = vcmask 130048
      %v396 = vsel %vm394, %v392, 0
      %v399 = vsel %vm394, %v393, 0
      %401 = vmatprep.subr.bf16.mxu0 %v383
      %402 = vmatpush1.bf16.msra.mxu0 %v382
      %403 = vmatprep.subr.bf16.mxu0 0
      %404 = vmatpush1.bf16.msra.mxu0 0
      %405 = vmatprep.subr.bf16.mxu0 0
      %406 = vmatpush1.bf16.msra.mxu0 0
      %407 = vmatprep.subr.bf16.mxu0 0
      %408 = vmatpush1.bf16.msra.mxu0 0
      %409 = vmatprep.subr.bf16.mxu0 0
      %410 = vmatpush1.bf16.msra.mxu0 0
      %411 = vmatprep.subr.bf16.mxu0 0
      %412 = vmatpush1.bf16.msra.mxu0 0
      %413 = vmatprep.subr.bf16.mxu0 0
      %414 = vmatpush1.bf16.msra.mxu0 0
      %415 = vmatprep.subr.bf16.mxu0 0
      %416 = vmatpush1.bf16.msra.mxu0 0
      %417 = vmatprep.subr.bf16.mxu0 0
      %418 = vmatpush1.bf16.msra.mxu0 0
      %419 = vmatprep.subr.bf16.mxu0 0
      %420 = vmatpush1.bf16.msra.mxu0 0
      %421 = vmatprep.subr.bf16.mxu0 0
      %422 = vmatpush1.bf16.msra.mxu0 0
      %423 = vmatprep.subr.bf16.mxu0 0
      %424 = vmatpush1.bf16.msra.mxu0 0
      %425 = vmatprep.subr.bf16.mxu0 0
      %426 = vmatpush1.bf16.msra.mxu0 0
      %427 = vmatprep.subr.bf16.mxu0 0
      %428 = vmatpush1.bf16.msra.mxu0 0
      %429 = vmatprep.subr.bf16.mxu0 0
      %430 = vmatpush1.bf16.msra.mxu0 0
      %431 = vmatprep.subr.bf16.mxu0 0
      %432 = vmatpush1.bf16.msra.mxu0 0
      %433 = vmatprep.mubr.bf16.mxu0 0
      %434 = vmatmul.mubr.bf16.gmra.mrb[0].mxu0 %v396
      %v435 = vpop.f32.mrb[0].mxu0
      %v436 = vadd.f32 0.0, %v435
      %v437 = vpop.f32.mrb[0].mxu0
      %v438 = vadd.f32 0.0, %v437
      %v439 = vpop.f32.mrb[0].mxu0
      %v440 = vadd.f32 0.0, %v439
      %v441 = vpop.f32.mrb[0].mxu0
      %v442 = vadd.f32 0.0, %v441
      %443 = vmatprep.mubr.bf16.mxu0 0
      %444 = vmatmul.mubr.bf16.gmra.mrb[0].mxu0 %v399
      %v445 = vpop.f32.mrb[0].mxu0
      %v446 = vadd.f32 0.0, %v445
      %v447 = vpop.f32.mrb[0].mxu0
      %v448 = vadd.f32 0.0, %v447
      %v449 = vpop.f32.mrb[0].mxu0
      %v450 = vadd.f32 0.0, %v449
      %v451 = vpop.f32.mrb[0].mxu0
      %v452 = vadd.f32 0.0, %v451
      %453 = vdwg.mxu0
      %v454 = vxor.u32 %v436, 2147483648
      %v455 = vxor.u32 %v438, 2147483648
      %v456 = vxor.u32 %v440, 2147483648
      %v457 = vxor.u32 %v442, 2147483648
      %v458 = vxor.u32 %v446, 2147483648
      %v459 = vxor.u32 %v448, 2147483648
      %v460 = vxor.u32 %v450, 2147483648
      %v461 = vxor.u32 %v452, 2147483648
      %v462 = vmul.f32 %v454, 1.442695
      %v463 = vpow.pop %v462
      %v464 = vmul.f32 %v455, 1.442695
      %v465 = vpow.pop %v464
      %v466 = vmul.f32 %v456, 1.442695
      %v467 = vpow.pop %v466
      %v468 = vmul.f32 %v457, 1.442695
      %v469 = vpow.pop %v468
      %v470 = vmul.f32 %v458, 1.442695
      %v471 = vpow.pop %v470
      %v472 = vmul.f32 %v459, 1.442695
      %v473 = vpow.pop %v472
      %v474 = vmul.f32 %v460, 1.442695
      %v475 = vpow.pop %v474
      %v476 = vmul.f32 %v461, 1.442695
      %v477 = vpow.pop %v476
      %v478 = vadd.f32 %v463, 1.0
      %v479 = vadd.f32 %v465, 1.0
      %v480 = vadd.f32 %v467, 1.0
      %v481 = vadd.f32 %v469, 1.0
      %v482 = vadd.f32 %v471, 1.0
      %v483 = vadd.f32 %v473, 1.0
      %v484 = vadd.f32 %v475, 1.0
      %v485 = vadd.f32 %v477, 1.0
      %v486 = vrcp.pop %v478
      %v487 = vmul.f32 1.0, %v486
      %v488 = vrcp.pop %v479
      %v489 = vmul.f32 1.0, %v488
      %v490 = vrcp.pop %v480
      %v491 = vmul.f32 1.0, %v490
      %v492 = vrcp.pop %v481
      %v493 = vmul.f32 1.0, %v492
      %v494 = vrcp.pop %v482
      %v495 = vmul.f32 1.0, %v494
      %v496 = vrcp.pop %v483
      %v497 = vmul.f32 1.0, %v496
      %v498 = vrcp.pop %v484
      %v499 = vmul.f32 1.0, %v498
      %v500 = vrcp.pop %v485
      %v501 = vmul.f32 1.0, %v500
      %v502 = vmul.f32 %v436, %v487
      %v503 = vmul.f32 %v438, %v489
      %v504 = vmul.f32 %v440, %v491
      %v505 = vmul.f32 %v442, %v493
      %v506 = vmul.f32 %v446, %v495
      %v507 = vmul.f32 %v448, %v497
      %v508 = vmul.f32 %v450, %v499
      %v509 = vmul.f32 %v452, %v501
      %510 = vst [vmem:[%s258] sm:$0xff] %v502
      %511 = vst [vmem:[%s258 + $0x8] sm:$0xff] %v503
      %512 = vst [vmem:[%s258 + $0x10] sm:$0xff] %v504
      %513 = vst [vmem:[%s258 + $0x18] sm:$0xff] %v505
      %514 = vst [vmem:[%s258 + $0x20] sm:$0xff] %v506
      %515 = vst [vmem:[%s258 + $0x28] sm:$0xff] %v507
      %516 = vst [vmem:[%s258 + $0x30] sm:$0xff] %v508
      %517 = vst [vmem:[%s258 + $0x38] sm:$0xff] %v509
      %518 = vmatprep.subr.mxu0 0.0
      %519 = vmatpush1.msra.mxu0 0.00390625
      %520 = vmatprep.subr.mxu0 0.0
      %521 = vmatpush1.msra.mxu0 0.00390625
      %522 = vmatprep.subr.mxu0 0.0
      %523 = vmatpush1.msra.mxu0 0.00390625
      %524 = vmatprep.subr.mxu0 0.0
      %525 = vmatpush1.msra.mxu0 0.00390625
      %526 = vmatprep.subr.mxu0 0.0
      %527 = vmatpush1.msra.mxu0 0.00390625
      %528 = vmatprep.subr.mxu0 0.0
      %529 = vmatpush1.msra.mxu0 0.00390625
      %530 = vmatprep.subr.mxu0 0.0
      %531 = vmatpush1.msra.mxu0 0.00390625
      %532 = vmatprep.subr.mxu0 0.0
      %533 = vmatpush1.msra.mxu0 0.00390625
      %534 = vmatprep.subr.mxu0 0.0
      %535 = vmatpush1.msra.mxu0 0.00390625
      %536 = vmatprep.subr.mxu0 0.0
      %537 = vmatpush1.msra.mxu0 0.00390625
      %538 = vmatprep.subr.mxu0 0.0
      %539 = vmatpush1.msra.mxu0 0.00390625
      %540 = vmatprep.subr.mxu0 0.0
      %541 = vmatpush1.msra.mxu0 0.00390625
      %542 = vmatprep.subr.mxu0 0.0
      %543 = vmatpush1.msra.mxu0 0.00390625
      %544 = vmatprep.subr.mxu0 0.0
      %545 = vmatpush1.msra.mxu0 0.00390625
      %546 = vmatprep.subr.mxu0 0.0
      %547 = vmatpush1.msra.mxu0 0.00390625
      %548 = vmatprep.subr.mxu0 0.0
      %549 = vmatpush1.msra.mxu0 0.00390625
      %550 = vmatprep.subr.mxu0 0.0
      %551 = vmatpush1.msra.mxu0 0.00390625
      %552 = vmatprep.subr.mxu0 0.0
      %553 = vmatpush1.msra.mxu0 0.00390625
      %554 = vmatprep.subr.mxu0 0.0
      %555 = vmatpush1.msra.mxu0 0.00390625
      %556 = vmatprep.subr.mxu0 0.0
      %557 = vmatpush1.msra.mxu0 0.00390625
      %558 = vmatprep.subr.mxu0 0.0
      %559 = vmatpush1.msra.mxu0 0.00390625
      %560 = vmatprep.subr.mxu0 0.0
      %561 = vmatpush1.msra.mxu0 0.00390625
      %562 = vmatprep.subr.mxu0 0.0
      %563 = vmatpush1.msra.mxu0 0.00390625
      %564 = vmatprep.subr.mxu0 0.0
      %565 = vmatpush1.msra.mxu0 0.00390625
      %566 = vmatprep.subr.mxu0 0.0
      %567 = vmatpush1.msra.mxu0 0.00390625
      %568 = vmatprep.subr.mxu0 0.0
      %569 = vmatpush1.msra.mxu0 0.00390625
      %570 = vmatprep.subr.mxu0 0.0
      %571 = vmatpush1.msra.mxu0 0.00390625
      %572 = vmatprep.subr.mxu0 0.0
      %573 = vmatpush1.msra.mxu0 0.00390625
      %574 = vmatprep.subr.mxu0 0.0
      %575 = vmatpush1.msra.mxu0 0.00390625
      %576 = vmatprep.subr.mxu0 0.0
      %577 = vmatpush1.msra.mxu0 0.00390625
      %578 = vmatprep.subr.mxu0 0.0
      %579 = vmatpush1.msra.mxu0 0.00390625
      %580 = vmatprep.subr.mxu0 0.0
      %581 = vmatpush1.msra.mxu0 0.00390625
      %582 = vmatprep.mubr.f32.mxu0 %v503
      %583 = vmatmul.mubr.f32.gmra.mrb[0].mxu0 %v502
      %v584 = vpop.f32.mrb[0].mxu0
      %v585 = vadd.f32 0.0, %v584
      %v586 = vpop.f32.mrb[0].mxu0
      %587 = vmatprep.mubr.f32.mxu0 %v505
      %588 = vmatmul.mubr.f32.gmra.mrb[0].mxu0 %v504
      %v589 = vpop.f32.mrb[0].mxu0
      %v590 = vadd.f32 0.0, %v589
      %v591 = vpop.f32.mrb[0].mxu0
      %592 = vmatprep.mubr.f32.mxu0 %v507
      %593 = vmatmul.mubr.f32.gmra.mrb[0].mxu0 %v506
      %v594 = vpop.f32.mrb[0].mxu0
      %v595 = vadd.f32 0.0, %v594
      %v596 = vpop.f32.mrb[0].mxu0
      %597 = vmatprep.mubr.f32.mxu0 %v509
      %598 = vmatmul.mubr.f32.gmra.mrb[0].mxu0 %v508
      %v599 = vpop.f32.mrb[0].mxu0
      %v600 = vadd.f32 0.0, %v599
      %v601 = vpop.f32.mrb[0].mxu0
      %602 = vdwg.mxu0
      %v603 = vld [vmem:[%s3] sm:$0x3]
      %v604 = vld [vmem:[%s4] sm:$0x3]
      %vm605 = vcmask 261120
      %v607 = vsel %vm605, %v603, 0
      %609 = vmatprep.subr.mxu0 0.0
      %610 = vmatpush1.msra.mxu0 %v585
      %611 = vmatprep.subr.mxu0 0.0
      %612 = vmatpush1.msra.mxu0 %v590
      %613 = vmatprep.subr.mxu0 0.0
      %614 = vmatpush1.msra.mxu0 %v595
      %615 = vmatprep.subr.mxu0 0.0
      %616 = vmatpush1.msra.mxu0 %v600
      %617 = vmatprep.subr.mxu0 0.0
      %618 = vmatpush1.msra.mxu0 0.0
      %619 = vmatprep.subr.mxu0 0.0
      %620 = vmatpush1.msra.mxu0 0.0
      %621 = vmatprep.subr.mxu0 0.0
      %622 = vmatpush1.msra.mxu0 0.0
      %623 = vmatprep.subr.mxu0 0.0
      %624 = vmatpush1.msra.mxu0 0.0
      %625 = vmatprep.subr.mxu0 0.0
      %626 = vmatpush1.msra.mxu0 0.0
      %627 = vmatprep.subr.mxu0 0.0
      %628 = vmatpush1.msra.mxu0 0.0
      %629 = vmatprep.subr.mxu0 0.0
      %630 = vmatpush1.msra.mxu0 0.0
      %631 = vmatprep.subr.mxu0 0.0
      %632 = vmatpush1.msra.mxu0 0.0
      %633 = vmatprep.subr.mxu0 0.0
      %634 = vmatpush1.msra.mxu0 0.0
      %635 = vmatprep.subr.mxu0 0.0
      %636 = vmatpush1.msra.mxu0 0.0
      %637 = vmatprep.subr.mxu0 0.0
      %638 = vmatpush1.msra.mxu0 0.0
      %639 = vmatprep.subr.mxu0 0.0
      %640 = vmatpush1.msra.mxu0 0.0
      %641 = vmatprep.subr.mxu0 0.0
      %642 = vmatpush1.msra.mxu0 0.0
      %643 = vmatprep.subr.mxu0 0.0
      %644 = vmatpush1.msra.mxu0 0.0
      %645 = vmatprep.subr.mxu0 0.0
      %646 = vmatpush1.msra.mxu0 0.0
      %647 = vmatprep.subr.mxu0 0.0
      %648 = vmatpush1.msra.mxu0 0.0
      %649 = vmatprep.subr.mxu0 0.0
      %650 = vmatpush1.msra.mxu0 0.0
      %651 = vmatprep.subr.mxu0 0.0
      %652 = vmatpush1.msra.mxu0 0.0
      %653 = vmatprep.subr.mxu0 0.0
      %654 = vmatpush1.msra.mxu0 0.0
      %655 = vmatprep.subr.mxu0 0.0
      %656 = vmatpush1.msra.mxu0 0.0
      %657 = vmatprep.subr.mxu0 0.0
      %658 = vmatpush1.msra.mxu0 0.0
      %659 = vmatprep.subr.mxu0 0.0
      %660 = vmatpush1.msra.mxu0 0.0
      %661 = vmatprep.subr.mxu0 0.0
      %662 = vmatpush1.msra.mxu0 0.0
      %663 = vmatprep.subr.mxu0 0.0
      %664 = vmatpush1.msra.mxu0 0.0
      %665 = vmatprep.subr.mxu0 0.0
      %666 = vmatpush1.msra.mxu0 0.0
      %667 = vmatprep.subr.mxu0 0.0
      %668 = vmatpush1.msra.mxu0 0.0
      %669 = vmatprep.subr.mxu0 0.0
      %670 = vmatpush1.msra.mxu0 0.0
      %671 = vmatprep.subr.mxu0 0.0
      %672 = vmatpush1.msra.mxu0 0.0
      %673 = vmatprep.mubr.f32.mxu0 0.0
      %674 = vmatmul.mubr.f32.gmra.mrb[0].mxu0 %v607
      %v675 = vpop.f32.mrb[0].mxu0
      %v676 = vadd.f32 %v604, %v675
      %v677 = vpop.f32.mrb[0].mxu0
      %678 = vdwg.mxu0
      %vm679 = vcmask 1024
      %680 = vst.msk [vmem:[%s262] sm:$0x3] %vm679, %v676
      %p681 = scmp.lt.s32.totalorder %s18, 1
      %s682 = scalar_select %p681, %s18, 1
      %s683 = smul.addr %s682, 8
      %s684 = smul.addr %s683, 8
      %s685 = scalar_lea.vmem %s5, %s684
      %p686 = scmp.lt.s32.totalorder %s18, 1
      %s687 = scalar_select %p686, %s18, 1
      %s688 = smul.addr %s687, 2
      %s689 = scalar_lea.vmem %s6, %s688
      // Predicated region
      $region41: #{custom_model_v2_forward.1} parent=39 // pred_check
        %p690 = pneg %p146
      $region42: #{custom_model_v2_forward.1} parent=39 // pred_check_branch
        %692 = sbr.rel (%p690) target = $region44
      $region43: #{custom_model_v2_forward.1} parent=39 // pred_region
        _
      $region44: #{custom_model_v2_forward.1} parent=39 // pred_fallthru
        _
      // Predicated region
      $region45: #{custom_model_v2_forward.1} parent=39 // pred_check
        %p693 = pneg %p172
      $region46: #{custom_model_v2_forward.1} parent=39 // pred_check_branch
        %695 = sbr.rel (%p693) target = $region48
      $region47: #{custom_model_v2_forward.1} parent=39 // pred_region
        _
      $region48: #{custom_model_v2_forward.1} parent=39 // pred_fallthru
        _
    $region40: #{custom_model_v2_forward.1} parent=5 // pred_fallthru
      _
    %p696 = scmp.le.s32.totalorder 2, %s13
    // Predicated region
    $region49: #{custom_model_v2_forward.1} parent=5 // pred_check
      %p697 = pneg %p696
    $region50: #{custom_model_v2_forward.1} parent=5 // pred_check_branch
      %699 = sbr.rel (%p697) target = $region52
    $region51: #{custom_model_v2_forward.1} parent=5 // pred_region
      %s700 = ssub.s32 %s13, 2
      // Predicated region
      $region53: #{custom_model_v2_forward.1} parent=51 // pred_check
        %p701 = pneg %p152
      $region54: #{custom_model_v2_forward.1} parent=51 // pred_check_branch
        %703 = sbr.rel (%p701) target = $region56
      $region55: #{custom_model_v2_forward.1} parent=51 // pred_region
        %p704 = scmp.lt.s32.totalorder %s19, 1
        %s705 = scalar_select %p704, %s19, 1
        %s706 = smul.addr %s705, 8
        %s707 = smul.addr %s706, 8
        %s708 = scalar_lea.vmem %s5, %s707
      $region56: #{custom_model_v2_forward.1} parent=51 // pred_fallthru
        _
      // Predicated region
      $region57: #{custom_model_v2_forward.1} parent=51 // pred_check
        %p709 = pneg %p178
      $region58: #{custom_model_v2_forward.1} parent=51 // pred_check_branch
        %711 = sbr.rel (%p709) target = $region60
      $region59: #{custom_model_v2_forward.1} parent=51 // pred_region
        %p712 = scmp.lt.s32.totalorder %s19, 1
        %s713 = scalar_select %p712, %s19, 1
        %s714 = smul.addr %s713, 2
        %s715 = scalar_lea.vmem %s6, %s714
      $region60: #{custom_model_v2_forward.1} parent=51 // pred_fallthru
        _
    $region52: #{custom_model_v2_forward.1} parent=5 // pred_fallthru
      _
  $region6: #{custom_model_v2_forward.1} parent=0 // loop_footer
    %s17 = sadd.s32 1, %s13
  $region7: #{custom_model_v2_forward.1} parent=0 // loop_footer_branch
    %12 = sbr.rel target = $region3
  $region8: #{custom_model_v2_forward.1} parent=0 // loop_exit
    _

</llo_original>
